<compile_context>
chip_gen: v7x
topology: tpu7x:2x2x1
jax: 0.10.0
libtpu: 0.0.40
codegen_flags: <defaults>
</compile_context>

<pallas_src>
import math

import jax
import jax.numpy as jnp
from jax import lax
from jax.experimental import pallas as pl
from jax.experimental.pallas import tpu as pltpu


def _round_up(x, m):
    return ((x + m - 1) // m) * m


def _poly_mul_kernel(tgt_ref, w_ref, b0_ref, u_ref, out_ref):
    tb, k = tgt_ref.shape
    # Flattened one-hot over (side, pos, val): lane l is "hot" iff tgt[b, l] == l.
    # Padded rows/lanes carry target -1, so they never match (contribute zero).
    lane = lax.broadcasted_iota(jnp.int32, (tb, k), 1)
    oh = (tgt_ref[...] == lane).astype(jnp.float32)                  # (TB, K_pad)

    # encode(x) | encode(y) -> linear0: all weights pre-folded into w_ref (K_pad, M).
    act = jnp.dot(oh, w_ref[...], preferred_element_type=jnp.float32) + b0_ref[...]
    act = jnp.maximum(act, 0.0)                                       # relu

    # PolynomialUnembed with pre-transposed resident weights (M, pp_pad).
    out_ref[...] = jnp.dot(act, u_ref[...], preferred_element_type=jnp.float32)


def poly_mul_perceptron(poly_x, poly_y, params):
    table, wup, mix, w0, b0, u = params
    B, p = poly_x.shape
    D = wup.shape[0]              # poly_dim
    M = w0.shape[0]               # model_dim
    pp = p * p
    K = 2 * pp                    # contraction dim of the folded encode matmul
    k_pad = _round_up(K, 128)     # lane-dense K
    pp_pad = _round_up(pp, 128)   # lane-dense output columns

    # ---- fold the weight-only chain outside the kernel ----------------------
    tproj = table @ wup.T                       # (p, D)   embed -> proj_up
    a_mat = tproj @ w0[:, :D].T                 # (p, M)   x-side of linear0
    b_mat = tproj @ w0[:, D:].T                 # (p, M)   y-side of linear0
    mix_v = mix.reshape(p, 1, 1)                # proj_mix weights, one per position
    w_x = (mix_v * a_mat[None, :, :]).reshape(pp, M)     # row = pos*p + val
    w_y = (mix_v * b_mat[None, :, :]).reshape(pp, M)
    w_cat = jnp.zeros((k_pad, M), jnp.float32)
    w_cat = w_cat.at[:pp].set(w_x).at[pp:K].set(w_y)
    u_t = jnp.zeros((M, pp_pad), jnp.float32).at[:, :pp].set(u.T)     # (M, pp_pad)
    # TODO(synk): as p / model_dim grow toward the VMEM limit, mark the resident
    # weight specs pipeline_mode=pl.Buffered(1) and/or cast folded weights to bf16;
    # kept f32 / default buffering here to match reference numerics at toy sizes.

    # ---- lane-dense one-hot targets (data plumbing only, no learned compute) --
    pxy = jnp.concatenate([poly_x, poly_y], axis=1).astype(jnp.int32)  # (B, 2p)
    slot_base = (jnp.arange(2 * p, dtype=jnp.int32) * p)[None, :]      # (1, 2p)
    tgt = jnp.repeat(pxy + slot_base, p, axis=1)                       # (B, K)

    # ---- batch tiling: >=2 grid blocks whenever B > 8, cap 1024 rows ---------
    if B <= 8:
        TB = 8
    else:
        TB = min(_round_up((B + 1) // 2, 8), 1024)
    n_blocks = (B + TB - 1) // TB
    B_pad = n_blocks * TB
    tgt_full = jnp.full((B_pad, k_pad), -1, jnp.int32).at[:B, :K].set(tgt)

    batched = lambda i: (i, 0)
    resident = lambda i: (0, 0)
    out = pl.pallas_call(
        _poly_mul_kernel,
        out_shape=jax.ShapeDtypeStruct((B_pad, pp_pad), jnp.float32),
        grid_spec=pltpu.PrefetchScalarGridSpec(
            num_scalar_prefetch=0,
            grid=(n_blocks,),
            in_specs=[
                pl.BlockSpec((TB, k_pad), batched),    # one-hot targets (int32)
                pl.BlockSpec((k_pad, M), resident),    # folded encode+linear0 weights
                pl.BlockSpec((1, M), resident),        # linear0 bias
                pl.BlockSpec((M, pp_pad), resident),   # unembed, pre-transposed
            ],
            out_specs=pl.BlockSpec((TB, pp_pad), batched),
        ),
        compiler_params=pltpu.CompilerParams(
            dimension_semantics=("parallel",),          # megacore sharding on v7x
        ),
    )(tgt_full, w_cat, b0, u_t)
    return out[:B, :pp].reshape(B, p, p)


def init_params(key, p, embed_dim, poly_dim, model_dim):
    ks = jax.random.split(key, 6)

    # nn.Embedding(p, embed_dim, max_norm=sqrt(embed_dim)): lookup-time renorm is
    # equivalent (for inference) to renorming the table once up front.
    table = jax.random.normal(ks[0], (p, embed_dim), jnp.float32)
    max_norm = math.sqrt(embed_dim)
    norms = jnp.linalg.norm(table, axis=1, keepdims=True)
    table = jnp.where(norms > max_norm, table * (max_norm / (norms + 1e-7)), table)

    wup = jax.random.normal(ks[1], (poly_dim, embed_dim), jnp.float32) / math.sqrt(embed_dim)
    mix = jax.random.normal(ks[2], (1, p), jnp.float32) / math.sqrt(p)
    w0 = jax.random.normal(ks[3], (model_dim, 2 * poly_dim), jnp.float32) / math.sqrt(2 * poly_dim)
    b0 = jax.random.normal(ks[4], (1, model_dim), jnp.float32) * 0.01
    # PolynomialUnembed: randn(p, p, model_dim) * sqrt(2 / model_dim), flattened.
    u = jax.random.normal(ks[5], (p * p, model_dim), jnp.float32) * math.sqrt(2.0 / model_dim)
    return (table, wup, mix, w0, b0, u)


def _reference(poly_x, poly_y, params):
    """Pure-JAX transcription of the PyTorch forward pass (for validation)."""
    table, wup, mix, w0, b0, u = params
    p = table.shape[0]

    def encode(coeffs):
        up = table[coeffs] @ wup.T                      # (B, p, D)
        return jnp.einsum("bpd,p->bd", up, mix[0])      # proj_mix over positions

    enc = jnp.concatenate([encode(poly_x), encode(poly_y)], axis=1)   # (B, 2D)
    act = jnp.maximum(enc @ w0.T + b0, 0.0)                            # (B, M)
    return jnp.einsum("bm,qm->bq", act, u).reshape(-1, p, p)           # (B, p, p)


if __name__ == "__main__":
    p, embed_dim, poly_dim, model_dim = 8, 16, 32, 64
    batch = 4

    key = jax.random.PRNGKey(0)
    kx, ky, kp = jax.random.split(key, 3)
    poly_x = jax.random.randint(kx, (batch, p), 0, p, dtype=jnp.int32)
    poly_y = jax.random.randint(ky, (batch, p), 0, p, dtype=jnp.int32)
    params = init_params(kp, p, embed_dim, poly_dim, model_dim)

    out = poly_mul_perceptron(poly_x, poly_y, params)
    jax.block_until_ready(out)
    assert out.shape == (batch, p, p)
    assert out.dtype == jnp.float32

    ref = _reference(poly_x, poly_y, params)
    assert jnp.allclose(out, ref, rtol=1e-3, atol=1e-3), "kernel != reference"
    print("KERNEL_OK")
</pallas_src>

<mosaic_0001>
module attributes {stable_mosaic.version = 11 : i64} {
  func.func @_poly_mul_kernel(%arg0: i32, %arg1: memref<8x128xi32, #tpu.memory_space<vmem>>, %arg2: memref<128x64xf32, #tpu.memory_space<vmem>>, %arg3: memref<1x64xf32, #tpu.memory_space<vmem>>, %arg4: memref<64x128xf32, #tpu.memory_space<vmem>>, %arg5: memref<8x128xf32, #tpu.memory_space<vmem>>) attributes {dimension_semantics = [#tpu.dimension_semantics<parallel>], iteration_bounds = array<i64: 1>, scalar_prefetch = 0 : i64, scratch_operands = 0 : i64, tpu.core_type = #tpu.core_type<tc>, window_params = [{transform_indices = @transform_0, window_bounds = array<i64: 8, 128>}, {pipeline_mode = #tpu.pipeline_mode<synchronous>, transform_indices = @transform_1, window_bounds = array<i64: 128, 64>}, {pipeline_mode = #tpu.pipeline_mode<synchronous>, transform_indices = @transform_2, window_bounds = array<i64: 1, 64>}, {pipeline_mode = #tpu.pipeline_mode<synchronous>, transform_indices = @transform_3, window_bounds = array<i64: 64, 128>}, {transform_indices = @transform_4, window_bounds = array<i64: 8, 128>}]} {
    %0 = tpu.iota {dimensions = array<i32: 1>} : vector<8x128xi32>
    %c0 = arith.constant 0 : index
    %c0_0 = arith.constant 0 : index
    %1 = vector.load %arg1[%c0, %c0_0] : memref<8x128xi32, #tpu.memory_space<vmem>>, vector<8x128xi32>
    %2 = arith.cmpi eq, %1, %0 : vector<8x128xi32>
    %3 = arith.extui %2 : vector<8x128xi1> to vector<8x128xi32>
    %4 = arith.sitofp %3 : vector<8x128xi32> to vector<8x128xf32>
    %c0_1 = arith.constant 0 : index
    %c0_2 = arith.constant 0 : index
    %5 = vector.load %arg2[%c0_1, %c0_2] : memref<128x64xf32, #tpu.memory_space<vmem>>, vector<128x64xf32>
    %cst = arith.constant dense<0.000000e+00> : vector<8x64xf32>
    %6 = tpu.matmul %4, %5, %cst {dimension_numbers = #tpu.dot_dimension_numbers<[1], [0], [0], [1], [0, 0, 1, 1], [], []>} : vector<8x128xf32>, vector<128x64xf32>, vector<8x64xf32> -> vector<8x64xf32>
    %c0_3 = arith.constant 0 : index
    %c0_4 = arith.constant 0 : index
    %7 = vector.load %arg3[%c0_3, %c0_4] : memref<1x64xf32, #tpu.memory_space<vmem>>, vector<1x64xf32>
    %8 = vector.broadcast %7 : vector<1x64xf32> to vector<8x64xf32>
    %9 = arith.addf %6, %8 : vector<8x64xf32>
    %cst_5 = arith.constant 0.000000e+00 : f32
    %10 = vector.broadcast %cst_5 : f32 to vector<8x64xf32>
    %11 = arith.maximumf %9, %10 : vector<8x64xf32>
    %c0_6 = arith.constant 0 : index
    %c0_7 = arith.constant 0 : index
    %12 = vector.load %arg4[%c0_6, %c0_7] : memref<64x128xf32, #tpu.memory_space<vmem>>, vector<64x128xf32>
    %cst_8 = arith.constant dense<0.000000e+00> : vector<8x128xf32>
    %13 = tpu.matmul %11, %12, %cst_8 {dimension_numbers = #tpu.dot_dimension_numbers<[1], [0], [0], [1], [0, 0, 1, 1], [], []>} : vector<8x64xf32>, vector<64x128xf32>, vector<8x128xf32> -> vector<8x128xf32>
    %c0_9 = arith.constant 0 : index
    %c0_10 = arith.constant 0 : index
    %14 = vector.load %arg5[%c0_9, %c0_10] : memref<8x128xf32, #tpu.memory_space<vmem>>, vector<8x128xf32>
    tpu.vector_store %arg5[%c0_9, %c0_10], %13 {strides = array<i32>} : memref<8x128xf32, #tpu.memory_space<vmem>>, vector<8x128xf32>,
    return
  }
  func.func @transform_0(%arg0: i32) -> (i32, i32) {
    %c0_i32 = arith.constant 0 : i32
    %c0_i32_0 = arith.constant 0 : i32
    return %arg0, %c0_i32 : i32, i32
  }
  func.func @transform_1(%arg0: i32) -> (i32, i32) {
    %c0_i32 = arith.constant 0 : i32
    %c0_i32_0 = arith.constant 0 : i32
    %c0_i32_1 = arith.constant 0 : i32
    return %c0_i32, %c0_i32_0 : i32, i32
  }
  func.func @transform_2(%arg0: i32) -> (i32, i32) {
    %c0_i32 = arith.constant 0 : i32
    %c0_i32_0 = arith.constant 0 : i32
    %c0_i32_1 = arith.constant 0 : i32
    return %c0_i32, %c0_i32_0 : i32, i32
  }
  func.func @transform_3(%arg0: i32) -> (i32, i32) {
    %c0_i32 = arith.constant 0 : i32
    %c0_i32_0 = arith.constant 0 : i32
    %c0_i32_1 = arith.constant 0 : i32
    return %c0_i32, %c0_i32_0 : i32, i32
  }
  func.func @transform_4(%arg0: i32) -> (i32, i32) {
    %c0_i32 = arith.constant 0 : i32
    %c0_i32_0 = arith.constant 0 : i32
    return %arg0, %c0_i32 : i32, i32
  }
}

</mosaic_0001>

<llo_original>
// kernel: tpu_custom_call.1
$region0: #{tpu_custom_call.1}
  #allocation0 [shape = 'u32[]', space=smem, size = 0x4, offset = 0x4, fixed_abs, tag = 'smem constant byte address 0x4 - core index']
  #allocation1 [shape = 'u32[144,128]{1,0:T(1,128)}', space=vmem, size = 0x12000, scoped, tag = 'internal scratch']
  %s0 = inlined_call_operand.vmem [shape: s32[8,128], index: 0, kind: input, shape index: {}]
  %s1 = inlined_call_operand.vmem [shape: f32[128,64], index: 1, kind: input, shape index: {}]
  %s2 = inlined_call_operand.vmem [shape: f32[1,64], index: 2, kind: input, shape index: {}]
  %s3 = inlined_call_operand.vmem [shape: f32[64,128], index: 3, kind: input, shape index: {}]
  %s4 = inlined_call_operand.hbm [shape: f32[8,128], index: 4, kind: output, shape index: {}]
  %s5 = sld [smem:[#allocation0]]
  $region26: #{tpu_custom_call.1} parent=0
    _
  %s7 = ssub.s32 1, %s5
  %s8 = scalar_select 0, %s7, %s5
  $region1: #{tpu_custom_call.1} parent=0
    #allocation2 [shape = 'u8[4096]{0}', space=vmem, size = 0x1000, scoped, tag = 'output window, operand 0, single buffered']
    #allocation3 [shape = 's32[1]{0}', space=sflag, size = 0x4, scoped, tag = 'scoped memory for tpu_custom_call.1']
    %9 = vsyncpa [#allocation3], 0
    // Predicated region
    $region2: #{tpu_custom_call.1} parent=1 // pred_check
      _
    $region3: #{tpu_custom_call.1} parent=1 // pred_check_branch
      %11 = sbr.rel (0) target = $region5
    $region4: #{tpu_custom_call.1} parent=1 // pred_region
      _
    $region5: #{tpu_custom_call.1} parent=1 // pred_fallthru
      _
    // Predicated region
    $region6: #{tpu_custom_call.1} parent=1 // pred_check
      _
    $region7: #{tpu_custom_call.1} parent=1 // pred_check_branch
      %13 = sbr.rel (0) target = $region9
    $region8: #{tpu_custom_call.1} parent=1 // pred_region
      _
    $region9: #{tpu_custom_call.1} parent=1 // pred_fallthru
      _
    // Predicated region
    $region10: #{tpu_custom_call.1} parent=1 // pred_check
      _
    $region11: #{tpu_custom_call.1} parent=1 // pred_check_branch
      %15 = sbr.rel (0) target = $region13
    $region12: #{tpu_custom_call.1} parent=1 // pred_region
      _
    $region13: #{tpu_custom_call.1} parent=1 // pred_fallthru
      _
    // Predicated region
    $region14: #{tpu_custom_call.1} parent=1 // pred_check
      _
    $region15: #{tpu_custom_call.1} parent=1 // pred_check_branch
      %17 = sbr.rel (0) target = $region17
    $region16: #{tpu_custom_call.1} parent=1 // pred_region
      _
    $region17: #{tpu_custom_call.1} parent=1 // pred_fallthru
      _
    %v18 = vlaneseq
    %v19 = vand.u32 %v18, 127
    %v20 = vld [vmem:[%s0] sm:$0xff]
    %vm21 = vcmp.eq.s32.totalorder %v20, %v19
    %v22 = vsel %vm21, 1, 0
    %v23 = vcvt.s32.f32 %v22
    %v24 = vld [vmem:[%s1] sm:$0xff]
    %v25 = vld [vmem:[%s1 + $0x8] sm:$0xff]
    %v26 = vld [vmem:[%s1 + $0x10] sm:$0xff]
    %v27 = vld [vmem:[%s1 + $0x18] sm:$0xff]
    %v28 = vld [vmem:[%s1 + $0x20] sm:$0xff]
    %v29 = vld [vmem:[%s1 + $0x28] sm:$0xff]
    %v30 = vld [vmem:[%s1 + $0x30] sm:$0xff]
    %v31 = vld [vmem:[%s1 + $0x38] sm:$0xff]
    %v32 = vld [vmem:[%s1 + $0x40] sm:$0xff]
    %v33 = vld [vmem:[%s1 + $0x48] sm:$0xff]
    %v34 = vld [vmem:[%s1 + $0x50] sm:$0xff]
    %v35 = vld [vmem:[%s1 + $0x58] sm:$0xff]
    %v36 = vld [vmem:[%s1 + $0x60] sm:$0xff]
    %v37 = vld [vmem:[%s1 + $0x68] sm:$0xff]
    %v38 = vld [vmem:[%s1 + $0x70] sm:$0xff]
    %v39 = vld [vmem:[%s1 + $0x78] sm:$0xff]
    %v40 = vld [vmem:[%s2] sm:$0x1]
    %v42 = vlaneseq
    %v43 = vshrl.u32 %v42, 7
    %v44 = vsub.s32 0, %v43
    %v45 = vrot.slane %v40, %v44
    %47 = vmatprep.subr.mxu0 0.0
    %48 = vmatpush1.msra.mxu0 %v24
    %49 = vmatprep.subr.mxu0 0.0
    %50 = vmatpush1.msra.mxu0 %v25
    %51 = vmatprep.subr.mxu0 0.0
    %52 = vmatpush1.msra.mxu0 %v26
    %53 = vmatprep.subr.mxu0 0.0
    %54 = vmatpush1.msra.mxu0 %v27
    %55 = vmatprep.subr.mxu0 0.0
    %56 = vmatpush1.msra.mxu0 %v28
    %57 = vmatprep.subr.mxu0 0.0
    %58 = vmatpush1.msra.mxu0 %v29
    %59 = vmatprep.subr.mxu0 0.0
    %60 = vmatpush1.msra.mxu0 %v30
    %61 = vmatprep.subr.mxu0 0.0
    %62 = vmatpush1.msra.mxu0 %v31
    %63 = vmatprep.subr.mxu0 0.0
    %64 = vmatpush1.msra.mxu0 %v32
    %65 = vmatprep.subr.mxu0 0.0
    %66 = vmatpush1.msra.mxu0 %v33
    %67 = vmatprep.subr.mxu0 0.0
    %68 = vmatpush1.msra.mxu0 %v34
    %69 = vmatprep.subr.mxu0 0.0
    %70 = vmatpush1.msra.mxu0 %v35
    %71 = vmatprep.subr.mxu0 0.0
    %72 = vmatpush1.msra.mxu0 %v36
    %73 = vmatprep.subr.mxu0 0.0
    %74 = vmatpush1.msra.mxu0 %v37
    %75 = vmatprep.subr.mxu0 0.0
    %76 = vmatpush1.msra.mxu0 %v38
    %77 = vmatprep.subr.mxu0 0.0
    %78 = vmatpush1.msra.mxu0 %v39
    %79 = vmatprep.subr.mxu0 0.0
    %80 = vmatpush1.msra.mxu0 0.0
    %81 = vmatprep.subr.mxu0 0.0
    %82 = vmatpush1.msra.mxu0 0.0
    %83 = vmatprep.subr.mxu0 0.0
    %84 = vmatpush1.msra.mxu0 0.0
    %85 = vmatprep.subr.mxu0 0.0
    %86 = vmatpush1.msra.mxu0 0.0
    %87 = vmatprep.subr.mxu0 0.0
    %88 = vmatpush1.msra.mxu0 0.0
    %89 = vmatprep.subr.mxu0 0.0
    %90 = vmatpush1.msra.mxu0 0.0
    %91 = vmatprep.subr.mxu0 0.0
    %92 = vmatpush1.msra.mxu0 0.0
    %93 = vmatprep.subr.mxu0 0.0
    %94 = vmatpush1.msra.mxu0 0.0
    %95 = vmatprep.subr.mxu0 0.0
    %96 = vmatpush1.msra.mxu0 0.0
    %97 = vmatprep.subr.mxu0 0.0
    %98 = vmatpush1.msra.mxu0 0.0
    %99 = vmatprep.subr.mxu0 0.0
    %100 = vmatpush1.msra.mxu0 0.0
    %101 = vmatprep.subr.mxu0 0.0
    %102 = vmatpush1.msra.mxu0 0.0
    %103 = vmatprep.subr.mxu0 0.0
    %104 = vmatpush1.msra.mxu0 0.0
    %105 = vmatprep.subr.mxu0 0.0
    %106 = vmatpush1.msra.mxu0 0.0
    %107 = vmatprep.subr.mxu0 0.0
    %108 = vmatpush1.msra.mxu0 0.0
    %109 = vmatprep.subr.mxu0 0.0
    %110 = vmatpush1.msra.mxu0 0.0
    %111 = vmatprep.mubr.f32.mxu0 0.0
    %112 = vmatmul.mubr.f32.gmra.mrb[0].mxu0 %v23
    %v113 = vpop.f32.mrb[0].mxu0
    %v114 = vadd.f32 %v45, %v113
    %v115 = vpop.f32.mrb[0].mxu0
    %116 = vdwg.mxu0
    %v117 = vmax.f32 %v114, 0.0
    %v118 = vld [vmem:[%s3] sm:$0xff]
    %v119 = vld [vmem:[%s3 + $0x8] sm:$0xff]
    %v120 = vld [vmem:[%s3 + $0x10] sm:$0xff]
    %v121 = vld [vmem:[%s3 + $0x18] sm:$0xff]
    %v122 = vld [vmem:[%s3 + $0x20] sm:$0xff]
    %v123 = vld [vmem:[%s3 + $0x28] sm:$0xff]
    %v124 = vld [vmem:[%s3 + $0x30] sm:$0xff]
    %v125 = vld [vmem:[%s3 + $0x38] sm:$0xff]
    %vm126 = vcmask 523264
    %v128 = vsel %vm126, %v117, 0
    %130 = vmatprep.subr.mxu0 0.0
    %131 = vmatpush1.msra.mxu0 %v118
    %132 = vmatprep.subr.mxu0 0.0
    %133 = vmatpush1.msra.mxu0 %v119
    %134 = vmatprep.subr.mxu0 0.0
    %135 = vmatpush1.msra.mxu0 %v120
    %136 = vmatprep.subr.mxu0 0.0
    %137 = vmatpush1.msra.mxu0 %v121
    %138 = vmatprep.subr.mxu0 0.0
    %139 = vmatpush1.msra.mxu0 %v122
    %140 = vmatprep.subr.mxu0 0.0
    %141 = vmatpush1.msra.mxu0 %v123
    %142 = vmatprep.subr.mxu0 0.0
    %143 = vmatpush1.msra.mxu0 %v124
    %144 = vmatprep.subr.mxu0 0.0
    %145 = vmatpush1.msra.mxu0 %v125
    %146 = vmatprep.subr.mxu0 0.0
    %147 = vmatpush1.msra.mxu0 0.0
    %148 = vmatprep.subr.mxu0 0.0
    %149 = vmatpush1.msra.mxu0 0.0
    %150 = vmatprep.subr.mxu0 0.0
    %151 = vmatpush1.msra.mxu0 0.0
    %152 = vmatprep.subr.mxu0 0.0
    %153 = vmatpush1.msra.mxu0 0.0
    %154 = vmatprep.subr.mxu0 0.0
    %155 = vmatpush1.msra.mxu0 0.0
    %156 = vmatprep.subr.mxu0 0.0
    %157 = vmatpush1.msra.mxu0 0.0
    %158 = vmatprep.subr.mxu0 0.0
    %159 = vmatpush1.msra.mxu0 0.0
    %160 = vmatprep.subr.mxu0 0.0
    %161 = vmatpush1.msra.mxu0 0.0
    %162 = vmatprep.subr.mxu0 0.0
    %163 = vmatpush1.msra.mxu0 0.0
    %164 = vmatprep.subr.mxu0 0.0
    %165 = vmatpush1.msra.mxu0 0.0
    %166 = vmatprep.subr.mxu0 0.0
    %167 = vmatpush1.msra.mxu0 0.0
    %168 = vmatprep.subr.mxu0 0.0
    %169 = vmatpush1.msra.mxu0 0.0
    %170 = vmatprep.subr.mxu0 0.0
    %171 = vmatpush1.msra.mxu0 0.0
    %172 = vmatprep.subr.mxu0 0.0
    %173 = vmatpush1.msra.mxu0 0.0
    %174 = vmatprep.subr.mxu0 0.0
    %175 = vmatpush1.msra.mxu0 0.0
    %176 = vmatprep.subr.mxu0 0.0
    %177 = vmatpush1.msra.mxu0 0.0
    %178 = vmatprep.subr.mxu0 0.0
    %179 = vmatpush1.msra.mxu0 0.0
    %180 = vmatprep.subr.mxu0 0.0
    %181 = vmatpush1.msra.mxu0 0.0
    %182 = vmatprep.subr.mxu0 0.0
    %183 = vmatpush1.msra.mxu0 0.0
    %184 = vmatprep.subr.mxu0 0.0
    %185 = vmatpush1.msra.mxu0 0.0
    %186 = vmatprep.subr.mxu0 0.0
    %187 = vmatpush1.msra.mxu0 0.0
    %188 = vmatprep.subr.mxu0 0.0
    %189 = vmatpush1.msra.mxu0 0.0
    %190 = vmatprep.subr.mxu0 0.0
    %191 = vmatpush1.msra.mxu0 0.0
    %192 = vmatprep.subr.mxu0 0.0
    %193 = vmatpush1.msra.mxu0 0.0
    %194 = vmatprep.mubr.f32.mxu0 0.0
    %195 = vmatmul.mubr.f32.gmra.mrb[0].mxu0 %v128
    %v196 = vpop.f32.mrb[0].mxu0
    %v197 = vadd.f32 0.0, %v196
    %v198 = vpop.f32.mrb[0].mxu0
    %199 = vdwg.mxu0
    %200 = vst [vmem:[#allocation2] sm:$0xff] %v197
    // Predicated region
    $region18: #{tpu_custom_call.1} parent=1 // pred_check
      _
    $region19: #{tpu_custom_call.1} parent=1 // pred_check_branch
      %202 = sbr.rel (0) target = $region21
    $region20: #{tpu_custom_call.1} parent=1 // pred_region
      %s204 = ssub.s32 128, 128
      %205 = vsyncadd [#allocation3], %s204
      %s207 = sshll.u32 [#allocation2], 4
      %s208 = int_to_ptr.vmem [resolvable:$true] %s207
      %210 = dma.vmem_to_hbm [thread:$0]  %s208, 128, %s4, [#allocation3]
    $region21: #{tpu_custom_call.1} parent=1 // pred_fallthru
      _
    // Predicated region
    $region22: #{tpu_custom_call.1} parent=1 // pred_check
      _
    $region23: #{tpu_custom_call.1} parent=1 // pred_check_branch
      %212 = sbr.rel (0) target = $region25
    $region24: #{tpu_custom_call.1} parent=1 // pred_region
      %213 = dma.done [#allocation3], 128
    $region25: #{tpu_custom_call.1} parent=1 // pred_fallthru
      _
    %214 = vsyncpa [#allocation3], 1

</llo_original>
